<compile_context>
chip_gen: v7x
topology: tpu7x:2x2x1
jax: 0.10.0
libtpu: 0.0.40
codegen_flags: <defaults>
</compile_context>

<pallas_src>
import jax
import jax.numpy as jnp
from jax.experimental import pallas as pl
from jax.experimental.pallas import tpu as pltpu

EPS = 1e-10


def l2norm_kernel(x_ref, o_ref):
    x = x_ref[...]                                       # (tile_n, D), input dtype
    xf = x.astype(jnp.float32)                           # f32 accumulation
    ss = jnp.sum(xf * xf, axis=-1, keepdims=True)        # (tile_n, 1) f32, XLU reduce
    inv = jax.lax.rsqrt(ss + EPS)                        # EUP rsqrt on narrow vector
    # Full-width multiply in the input dtype; only the (tile_n, 1) scale is cast.
    o_ref[...] = x * inv.astype(x.dtype)


def _vmem_limit_bytes():
    """3/4 of per-core VMEM (96 MiB on v5e/v6e, 48 MiB on v7x); safe fallback 48 MiB."""
    try:
        cap = pltpu.get_tpu_info().vmem_capacity_bytes
    except Exception:
        cap = 64 * 1024 * 1024
    return int(min(max(cap * 3 // 4, 32 * 1024 * 1024), 96 * 1024 * 1024))


def _choose_tile_n(n, d, itemsize, tile_n=None):
    """Row tile: multiple of 8, ~2 MiB input block (≈85% of HBM roofline per tile
    sweeps), clamped to the (8-rounded) row extent. Never shrinks below ~1 MiB just
    to create extra grid steps (the grid is a serial loop on v5e/v6e)."""
    n8 = max(8, ((n + 7) // 8) * 8)
    if tile_n is not None:
        # Clamp user override: multiple of 8 (sublane rule) and within the row extent.
        return min(max(8, (int(tile_n) // 8) * 8), n8)

    row_bytes = max(d * itemsize, 1)
    target_block_bytes = 2 * 1024 * 1024
    tile = max(8, (target_block_bytes // row_bytes) // 8 * 8)
    tile = min(tile, n8)

    # Prefer >=2 grid steps so both v7x TensorCores get work, but only if the block
    # stays >= ~1 MiB (below that the HBM roofline drops on v5e/v6e).
    if pl.cdiv(n, tile) < 2:
        half = max(8, ((tile // 2 + 7) // 8) * 8)
        if half < tile and half * row_bytes >= (1 << 20) and pl.cdiv(n, half) >= 2:
            tile = half
    return tile


def l2norm(x, *, tile_n=None, min_kernel_bytes=256 * 1024):
    """Row-wise L2 normalization of a 2-D array, matching the PyTorch module:
    out = x / sqrt(sum(x*x, axis=1) + eps)[:, None]."""
    N, D = x.shape
    itemsize = jnp.dtype(x.dtype).itemsize

    # Tiny-shape fast path: a fused XLA expression beats the fixed kernel overhead.
    if N * D * itemsize < min_kernel_bytes:
        xf = x.astype(jnp.float32)
        inv = jax.lax.rsqrt(jnp.sum(xf * xf, axis=-1, keepdims=True) + EPS)
        return x * inv.astype(x.dtype)

    tile_n = _choose_tile_n(N, D, itemsize, tile_n)

    return pl.pallas_call(
        l2norm_kernel,
        out_shape=jax.ShapeDtypeStruct((N, D), x.dtype),
        grid_spec=pltpu.PrefetchScalarGridSpec(
            num_scalar_prefetch=0,
            grid=(pl.cdiv(N, tile_n),),
            # Last block dim equals the full array dim D (legal per the (8,128) rule);
            # the partial last row-tile (N not a multiple of tile_n) is masked by Pallas
            # and the per-row reduction keeps garbage rows from touching valid rows.
            in_specs=[pl.BlockSpec((tile_n, D), lambda i: (i, 0))],
            out_specs=pl.BlockSpec((tile_n, D), lambda i: (i, 0)),
        ),
        compiler_params=pltpu.CompilerParams(
            dimension_semantics=("parallel",),
            vmem_limit_bytes=_vmem_limit_bytes(),
        ),
        cost_estimate=pl.CostEstimate(
            flops=3 * N * D,
            transcendentals=N,
            bytes_accessed=2 * N * D * itemsize,
        ),
    )(x)


def _reference(x):
    xf = x.astype(jnp.float32)
    norm = jnp.sqrt(jnp.sum(xf * xf, axis=1, keepdims=True) + EPS)
    return (xf / norm).astype(x.dtype)


if __name__ == "__main__":
    key = jax.random.PRNGKey(0)
    k1, k2, k3 = jax.random.split(key, 3)

    # Module-scale shape: 16 rows, hidden = 32 (default call -> tiny-shape fast path).
    x1 = jax.random.normal(k1, (16, 32), dtype=jnp.float32)
    out_fast = jax.block_until_ready(l2norm(x1))
    ref1 = _reference(x1)
    assert out_fast.shape == x1.shape and out_fast.dtype == x1.dtype
    assert jnp.allclose(out_fast, ref1, atol=1e-6, rtol=1e-5)

    # Same shape, forced through the Pallas kernel.
    out_k = jax.block_until_ready(l2norm(x1, min_kernel_bytes=0))
    assert out_k.shape == x1.shape and out_k.dtype == x1.dtype
    assert jnp.allclose(out_k, ref1, atol=1e-6, rtol=1e-5)

    # Ragged path: N not a multiple of 8, D not a multiple of 128 (masked last tile).
    x2 = jax.random.normal(k2, (13, 200), dtype=jnp.float32)
    out2 = jax.block_until_ready(l2norm(x2, min_kernel_bytes=0))
    ref2 = _reference(x2)
    assert out2.shape == x2.shape and out2.dtype == x2.dtype
    assert jnp.allclose(out2, ref2, atol=1e-6, rtol=1e-5)

    # bf16 path: f32 accumulation inside the kernel, multiply in bf16.
    x3 = jax.random.normal(k3, (64, 384), dtype=jnp.bfloat16)
    out3 = jax.block_until_ready(l2norm(x3, min_kernel_bytes=0))
    ref3 = _reference(x3)
    assert out3.shape == x3.shape and out3.dtype == x3.dtype
    assert jnp.allclose(out3.astype(jnp.float32), ref3.astype(jnp.float32),
                        atol=2e-2, rtol=2e-2)

    print("KERNEL_OK")
</pallas_src>

<mosaic_0001>
module attributes {stable_mosaic.version = 11 : i64} {
  func.func @l2norm_kernel(%arg0: i32, %arg1: memref<16x32xf32, #tpu.memory_space<vmem>>, %arg2: memref<16x32xf32, #tpu.memory_space<vmem>>) attributes {dimension_semantics = [#tpu.dimension_semantics<parallel>], iteration_bounds = array<i64: 1>, scalar_prefetch = 0 : i64, scratch_operands = 0 : i64, tpu.core_type = #tpu.core_type<tc>, window_params = [{transform_indices = @transform_0, window_bounds = array<i64: 16, 32>}, {transform_indices = @transform_1, window_bounds = array<i64: 16, 32>}]} {
    %c0 = arith.constant 0 : index
    %c0_0 = arith.constant 0 : index
    %0 = vector.load %arg1[%c0, %c0_0] : memref<16x32xf32, #tpu.memory_space<vmem>>, vector<16x32xf32>
    %1 = arith.mulf %0, %0 : vector<16x32xf32>
    %cst = arith.constant dense<0.000000e+00> : vector<16xf32>
    %2 = vector.multi_reduction <add>, %1, %cst [1] : vector<16x32xf32> to vector<16xf32>
    %3 = vector.shape_cast %2 : vector<16xf32> to vector<16x1xf32>
    %cst_1 = arith.constant 1.000000e-10 : f32
    %4 = vector.broadcast %cst_1 : f32 to vector<16x1xf32>
    %5 = arith.addf %3, %4 : vector<16x1xf32>
    %6 = math.rsqrt %5 : vector<16x1xf32>
    %7 = vector.broadcast %6 : vector<16x1xf32> to vector<16x32xf32>
    %8 = arith.mulf %0, %7 : vector<16x32xf32>
    %c0_2 = arith.constant 0 : index
    %c0_3 = arith.constant 0 : index
    %9 = vector.load %arg2[%c0_2, %c0_3] : memref<16x32xf32, #tpu.memory_space<vmem>>, vector<16x32xf32>
    tpu.vector_store %arg2[%c0_2, %c0_3], %8 {strides = array<i32>} : memref<16x32xf32, #tpu.memory_space<vmem>>, vector<16x32xf32>,
    return
  }
  func.func @transform_0(%arg0: i32) -> (i32, i32) {
    %c0_i32 = arith.constant 0 : i32
    %c0_i32_0 = arith.constant 0 : i32
    return %arg0, %c0_i32 : i32, i32
  }
  func.func @transform_1(%arg0: i32) -> (i32, i32) {
    %c0_i32 = arith.constant 0 : i32
    %c0_i32_0 = arith.constant 0 : i32
    return %arg0, %c0_i32 : i32, i32
  }
}

</mosaic_0001>

<llo_original>
// kernel: tpu_custom_call.1
$region0: #{tpu_custom_call.1}
  #allocation0 [shape = 'u32[]', space=smem, size = 0x4, offset = 0x4, fixed_abs, tag = 'smem constant byte address 0x4 - core index']
  #allocation1 [shape = 'u32[144,128]{1,0:T(1,128)}', space=vmem, size = 0x12000, scoped, tag = 'internal scratch']
  %s0 = inlined_call_operand.hbm [shape: f32[16,32], index: 0, kind: input, shape index: {}]
  %s1 = inlined_call_operand.hbm [shape: f32[16,32], index: 1, kind: output, shape index: {}]
  %s2 = sld [smem:[#allocation0]]
  $region18: #{tpu_custom_call.1} parent=0
    _
  %s4 = ssub.s32 1, %s2
  %s5 = scalar_select 0, %s4, %s2
  $region1: #{tpu_custom_call.1} parent=0
    #allocation2 [shape = 'u8[8192]{0}', space=vmem, size = 0x2000, scoped, tag = 'input window, operand 0, single buffered']
    #allocation3 [shape = 's32[1]{0}', space=sflag, size = 0x4, scoped, tag = 'scoped memory for tpu_custom_call.1']
    #allocation4 [shape = 's32[1]{0}', space=sflag, size = 0x4, scoped, tag = 'scoped memory for tpu_custom_call.1']
    #allocation5 [shape = 'u8[8192]{0}', space=vmem, size = 0x2000, scoped, tag = 'output window, operand 0, single buffered']
    %6 = vsyncpa [#allocation3], 0
    %7 = vsyncpa [#allocation4], 0
    // Predicated region
    $region2: #{tpu_custom_call.1} parent=1 // pred_check
      _
    $region3: #{tpu_custom_call.1} parent=1 // pred_check_branch
      %9 = sbr.rel (0) target = $region5
    $region4: #{tpu_custom_call.1} parent=1 // pred_region
      %s11 = ssub.s32 256, 256
      %12 = vsyncadd [#allocation3], %s11
      %s13 = sshll.u32 [#allocation2], 4
      %s14 = int_to_ptr.vmem [resolvable:$true] %s13
      %19 = dma.hbm_to_vmem [thread:$0]  %s0, 256, %s14, [#allocation3], 128, 128, 8
    $region5: #{tpu_custom_call.1} parent=1 // pred_fallthru
      _
    // Predicated region
    $region6: #{tpu_custom_call.1} parent=1 // pred_check
      _
    $region7: #{tpu_custom_call.1} parent=1 // pred_check_branch
      %21 = sbr.rel (0) target = $region9
    $region8: #{tpu_custom_call.1} parent=1 // pred_region
      %22 = dma.done [#allocation3], 256
    $region9: #{tpu_custom_call.1} parent=1 // pred_fallthru
      _
    %v23 = vld [vmem:[#allocation2] sm:$0xff]
    %v24 = vld [vmem:[#allocation2 + $0x8] sm:$0xff]
    %v25 = vmul.f32 %v23, %v23
    %v26 = vmul.f32 %v24, %v24
    %vm27 = vcmask 261120
    %v28 = vsel %vm27, %v25, 0.0
    %29 = vadd.xlane.f32.xlu0 %v28
    %v30 = vpop.xlane.xlu0 %29
    %v31 = vsel %vm27, %v26, 0.0
    %32 = vadd.xlane.f32.xlu0 %v31
    %v33 = vpop.xlane.xlu0 %32
    %v34 = vadd.f32 %v30, 1e-10
    %v35 = vadd.f32 %v33, 1e-10
    %v36 = vrsqrt.pop %v34
    %v37 = vrsqrt.pop %v35
    %v38 = vmul.f32 %v23, %v36
    %v39 = vmul.f32 %v24, %v37
    %40 = vst.msk [vmem:[#allocation5] sm:$0xff] %vm27, %v38
    %41 = vst.msk [vmem:[#allocation5 + $0x8] sm:$0xff] %vm27, %v39
    // Predicated region
    $region10: #{tpu_custom_call.1} parent=1 // pred_check
      _
    $region11: #{tpu_custom_call.1} parent=1 // pred_check_branch
      %43 = sbr.rel (0) target = $region13
    $region12: #{tpu_custom_call.1} parent=1 // pred_region
      %s45 = ssub.s32 256, 256
      %46 = vsyncadd [#allocation4], %s45
      %s47 = sshll.u32 [#allocation5], 4
      %s48 = int_to_ptr.vmem [resolvable:$true] %s47
      %53 = dma.vmem_to_hbm [thread:$0]  %s48, 256, %s1, [#allocation4], 128, 128, 8
    $region13: #{tpu_custom_call.1} parent=1 // pred_fallthru
      _
    // Predicated region
    $region14: #{tpu_custom_call.1} parent=1 // pred_check
      _
    $region15: #{tpu_custom_call.1} parent=1 // pred_check_branch
      %55 = sbr.rel (0) target = $region17
    $region16: #{tpu_custom_call.1} parent=1 // pred_region
      %56 = dma.done [#allocation4], 256
    $region17: #{tpu_custom_call.1} parent=1 // pred_fallthru
      _
    %57 = vsyncpa [#allocation3], 1
    %58 = vsyncpa [#allocation4], 1

</llo_original>
